<compile_context>
chip_gen: v7x
topology: tpu7x:2x2x1
jax: 0.10.0
libtpu: 0.0.40
codegen_flags: <defaults>
</compile_context>

<pallas_src>
import numpy as np
import jax
import jax.numpy as jnp
from jax.experimental import pallas as pl
from jax.experimental.pallas import tpu as pltpu


# ----------------------------------------------------------------------------
# Irreps bookkeeping (plain Python, mirrors the module's __init__)
# ----------------------------------------------------------------------------
def ir_dim(l):
    return 2 * l + 1


def build_vec2attn_specs(irreps_head, num_heads):
    """irreps_head: list of (mul, l).  Returns static slice specs and dims.

    Each spec is (in_start, in_size, out_start, blk) where
      in_size = num_heads * blk,  blk = mul * ir_dim(l).
    """
    specs = []
    in_start = 0
    out_start = 0
    for mul, l in irreps_head:
        blk = mul * ir_dim(l)              # per-head size for this irrep
        in_size = num_heads * blk          # size of this irrep block in x
        specs.append((in_start, in_size, out_start, blk))
        in_start += in_size
        out_start += blk
    d_in = in_start                        # irreps_mid_in.dim == H * head_dim
    head_dim = out_start                   # irreps_head.dim
    return specs, d_in, head_dim


def build_permutation_matrix(specs, num_heads, head_dim, d_in, dtype):
    """0/1 matrix P [d_in, d_in] such that out2d = x @ P reproduces the
    slice/reshape/concat of the PyTorch forward (flattened over heads)."""
    perm = np.empty((d_in,), dtype=np.int64)
    for (in_start, _in_size, out_start, blk) in specs:
        for h in range(num_heads):
            for k in range(blk):
                out_col = h * head_dim + out_start + k
                src_col = in_start + h * blk + k
                perm[out_col] = src_col
    P = np.zeros((d_in, d_in), dtype=np.float32)
    P[perm, np.arange(d_in)] = 1.0
    return jnp.asarray(P, dtype=dtype)


# ----------------------------------------------------------------------------
# Pallas kernel: one permutation matmul + one dense full-block store.
# ----------------------------------------------------------------------------
def _vec2attn_kernel(x_ref, p_ref, o_ref):
    # precision=HIGHEST keeps the f32 path exact (0/1 matrix => pure copy);
    # default precision would round x to bf16 on the MXU and be lossy.
    o_ref[...] = jnp.dot(
        x_ref[...], p_ref[...],
        preferred_element_type=jnp.float32,
        precision=jax.lax.Precision.HIGHEST,
    ).astype(o_ref.dtype)


# ----------------------------------------------------------------------------
# Tile sizing: biggest row tile under a VMEM budget that is safe on every
# generation (with vmem_limit_bytes raised to 32 MiB), rounded to the dtype's
# native sublane multiple, accounting for the double-buffered P block.
# ----------------------------------------------------------------------------
def _round_up(a, m):
    return -(-a // m) * m


def _sublane_multiple(dtype):
    # native second-to-last tile dim: 8 for 4-byte, 16 for 2-byte, 32 for 1-byte
    return max(8, 32 // jnp.dtype(dtype).itemsize)


def _choose_tile_n(N, d_in, d_out, dtype, requested=8192,
                   vmem_budget_bytes=20 * 1024 * 1024):
    itemsize = jnp.dtype(dtype).itemsize
    sub = _sublane_multiple(dtype)
    # P is an input with its own BlockSpec -> double-buffered; subtract it.
    p_bytes = 2 * d_in * d_out * itemsize
    budget = max(vmem_budget_bytes - p_bytes, 1 << 20)
    # double-buffered input + output row tiles dominate the rest.
    per_row = 2 * (d_in + d_out) * itemsize
    cap = max(sub, budget // max(per_row, 1))
    tile = min(requested, cap, _round_up(N, sub))
    tile = max(sub, (tile // sub) * sub)
    return tile


# ----------------------------------------------------------------------------
# Wrapper
# ----------------------------------------------------------------------------
def vec2attn_heads(x, irreps_head, num_heads, tile_n=8192):
    """x: [N, D_in] -> [N, num_heads, head_dim]."""
    specs, d_in, head_dim = build_vec2attn_specs(irreps_head, num_heads)
    N, D = x.shape
    assert D == d_in, f"expected x last dim {d_in}, got {D}"

    P = build_permutation_matrix(specs, num_heads, head_dim, d_in, x.dtype)

    tile = _choose_tile_n(N, d_in, d_in, x.dtype, requested=tile_n)
    itemsize = jnp.dtype(x.dtype).itemsize

    cost = pl.CostEstimate(
        flops=2 * N * d_in * d_in,
        transcendentals=0,
        bytes_accessed=2 * N * d_in * itemsize + d_in * d_in * itemsize,
    )

    out2d = pl.pallas_call(
        _vec2attn_kernel,
        out_shape=jax.ShapeDtypeStruct((N, d_in), x.dtype),
        grid_spec=pltpu.PrefetchScalarGridSpec(
            num_scalar_prefetch=0,
            grid=(pl.cdiv(N, tile),),               # ragged: Pallas masks tail
            in_specs=[
                pl.BlockSpec((tile, d_in), lambda i: (i, 0)),
                pl.BlockSpec((d_in, d_in), lambda i: (0, 0)),
            ],
            out_specs=pl.BlockSpec((tile, d_in), lambda i: (i, 0)),
        ),
        compiler_params=pltpu.CompilerParams(
            dimension_semantics=("parallel",),
            vmem_limit_bytes=32 * 1024 * 1024,
        ),
        cost_estimate=cost,
    )(x, P)

    # free row-major reshape (kernel output is already laid out as [N, H*hd])
    return out2d.reshape(N, num_heads, head_dim)


# ----------------------------------------------------------------------------
# Pure-JAX reference (mirrors the PyTorch forward exactly)
# ----------------------------------------------------------------------------
def vec2attn_heads_ref(x, irreps_head, num_heads):
    specs, _d_in, _head_dim = build_vec2attn_specs(irreps_head, num_heads)
    N = x.shape[0]
    out = []
    for (in_start, in_size, _, _) in specs:
        temp = x[:, in_start:in_start + in_size]
        temp = temp.reshape(N, num_heads, -1)
        out.append(temp)
    return jnp.concatenate(out, axis=2)


# ----------------------------------------------------------------------------
if __name__ == "__main__":
    # irreps_head = 8x0e + 4x1e + 2x2e  -> head_dim = 8 + 12 + 10 = 30
    irreps_head = [(8, 0), (4, 1), (2, 2)]
    num_heads = 4
    _, d_in, head_dim = build_vec2attn_specs(irreps_head, num_heads)  # d_in=120

    key = jax.random.PRNGKey(0)

    # Test 1: ragged N smaller than one tile (single masked grid step).
    N1 = 50
    x1 = jax.random.normal(key, (N1, d_in), dtype=jnp.float32)
    out1 = jax.block_until_ready(vec2attn_heads(x1, irreps_head, num_heads))
    ref1 = vec2attn_heads_ref(x1, irreps_head, num_heads)
    assert out1.shape == (N1, num_heads, head_dim), out1.shape
    assert jnp.allclose(out1, ref1), "mismatch vs reference (test 1)"

    # Test 2: multi-step ragged grid (forces a small tile -> 3 steps, last partial).
    N2 = 300
    x2 = jax.random.normal(jax.random.PRNGKey(1), (N2, d_in), dtype=jnp.float32)
    out2 = jax.block_until_ready(
        vec2attn_heads(x2, irreps_head, num_heads, tile_n=128))
    ref2 = vec2attn_heads_ref(x2, irreps_head, num_heads)
    assert out2.shape == (N2, num_heads, head_dim), out2.shape
    assert jnp.allclose(out2, ref2), "mismatch vs reference (test 2)"

    print("KERNEL_OK")
</pallas_src>

<mosaic_0001>
module attributes {stable_mosaic.version = 11 : i64} {
  func.func @_vec2attn_kernel(%arg0: i32, %arg1: memref<56x120xf32, #tpu.memory_space<vmem>>, %arg2: memref<120x120xf32, #tpu.memory_space<vmem>>, %arg3: memref<56x120xf32, #tpu.memory_space<vmem>>) attributes {dimension_semantics = [#tpu.dimension_semantics<parallel>], iteration_bounds = array<i64: 1>, scalar_prefetch = 0 : i64, scratch_operands = 0 : i64, tpu.core_type = #tpu.core_type<tc>, window_params = [{transform_indices = @transform_0, window_bounds = array<i64: 56, 120>}, {pipeline_mode = #tpu.pipeline_mode<synchronous>, transform_indices = @transform_1, window_bounds = array<i64: 120, 120>}, {transform_indices = @transform_2, window_bounds = array<i64: 56, 120>}]} {
    %c0 = arith.constant 0 : index
    %c0_0 = arith.constant 0 : index
    %0 = vector.load %arg1[%c0, %c0_0] : memref<56x120xf32, #tpu.memory_space<vmem>>, vector<56x120xf32>
    %c0_1 = arith.constant 0 : index
    %c0_2 = arith.constant 0 : index
    %1 = vector.load %arg2[%c0_1, %c0_2] : memref<120x120xf32, #tpu.memory_space<vmem>>, vector<120x120xf32>
    %cst = arith.constant dense<0.000000e+00> : vector<56x120xf32>
    %2 = tpu.matmul %0, %1, %cst {dimension_numbers = #tpu.dot_dimension_numbers<[1], [0], [0], [1], [0, 0, 1, 1], [], []>, precision = #tpu.contract_precision<fp32>} : vector<56x120xf32>, vector<120x120xf32>, vector<56x120xf32> -> vector<56x120xf32>
    %c0_3 = arith.constant 0 : index
    %c0_4 = arith.constant 0 : index
    %3 = vector.load %arg3[%c0_3, %c0_4] : memref<56x120xf32, #tpu.memory_space<vmem>>, vector<56x120xf32>
    tpu.vector_store %arg3[%c0_3, %c0_4], %2 {strides = array<i32>} : memref<56x120xf32, #tpu.memory_space<vmem>>, vector<56x120xf32>,
    return
  }
  func.func @transform_0(%arg0: i32) -> (i32, i32) {
    %c0_i32 = arith.constant 0 : i32
    %c0_i32_0 = arith.constant 0 : i32
    return %arg0, %c0_i32 : i32, i32
  }
  func.func @transform_1(%arg0: i32) -> (i32, i32) {
    %c0_i32 = arith.constant 0 : i32
    %c0_i32_0 = arith.constant 0 : i32
    %c0_i32_1 = arith.constant 0 : i32
    return %c0_i32, %c0_i32_0 : i32, i32
  }
  func.func @transform_2(%arg0: i32) -> (i32, i32) {
    %c0_i32 = arith.constant 0 : i32
    %c0_i32_0 = arith.constant 0 : i32
    return %arg0, %c0_i32 : i32, i32
  }
}

</mosaic_0001>

<llo_original>
// kernel: tpu_custom_call.1
$region0: #{tpu_custom_call.1}
  #allocation0 [shape = 'u32[]', space=smem, size = 0x4, offset = 0x4, fixed_abs, tag = 'smem constant byte address 0x4 - core index']
  #allocation1 [shape = 'u32[144,128]{1,0:T(1,128)}', space=vmem, size = 0x12000, scoped, tag = 'internal scratch']
  %s0 = inlined_call_operand.hbm [shape: f32[50,120], index: 0, kind: input, shape index: {}]
  %s1 = inlined_call_operand.hbm [shape: f32[120,120], index: 1, kind: input, shape index: {}]
  %s2 = inlined_call_operand.hbm [shape: f32[50,120], index: 2, kind: output, shape index: {}]
  %s3 = sld [smem:[#allocation0]]
  $region26: #{tpu_custom_call.1} parent=0
    _
  %s5 = ssub.s32 1, %s3
  %s6 = scalar_select 0, %s5, %s3
  $region1: #{tpu_custom_call.1} parent=0
    #allocation2 [shape = 'u8[28672]{0}', space=vmem, size = 0x7000, scoped, tag = 'input window, operand 0, single buffered']
    #allocation3 [shape = 's32[1]{0}', space=sflag, size = 0x4, scoped, tag = 'scoped memory for tpu_custom_call.1']
    #allocation4 [shape = 's32[1]{0}', space=sflag, size = 0x4, scoped, tag = 'scoped memory for tpu_custom_call.1']
    #allocation5 [shape = 'u8[61440]{0}', space=vmem, size = 0xf000, scoped, tag = 'input window, operand 1, single buffered']
    #allocation6 [shape = 's32[1]{0}', space=sflag, size = 0x4, scoped, tag = 'scoped memory for tpu_custom_call.1']
    #allocation7 [shape = 'u8[28672]{0}', space=vmem, size = 0x7000, scoped, tag = 'output window, operand 0, single buffered']
    %7 = vsyncpa [#allocation3], 0
    %8 = vsyncpa [#allocation6], 0
    %9 = vsyncpa [#allocation4], 0
    // Predicated region
    $region2: #{tpu_custom_call.1} parent=1 // pred_check
      _
    $region3: #{tpu_custom_call.1} parent=1 // pred_check_branch
      %11 = sbr.rel (0) target = $region5
    $region4: #{tpu_custom_call.1} parent=1 // pred_region
      %s13 = ssub.s32 896, 896
      %14 = vsyncadd [#allocation3], %s13
      %s15 = sshll.u32 [#allocation2], 4
      %s16 = int_to_ptr.vmem [resolvable:$true] %s15
      %21 = dma.hbm_to_vmem [thread:$0]  %s0, 896, %s16, [#allocation3], 128, 128, 8
    $region5: #{tpu_custom_call.1} parent=1 // pred_fallthru
      _
    // Predicated region
    $region6: #{tpu_custom_call.1} parent=1 // pred_check
      _
    $region7: #{tpu_custom_call.1} parent=1 // pred_check_branch
      %23 = sbr.rel (0) target = $region9
    $region8: #{tpu_custom_call.1} parent=1 // pred_region
      %s25 = ssub.s32 1920, 1920
      %26 = vsyncadd [#allocation6], %s25
      %s27 = sshll.u32 [#allocation5], 4
      %s28 = int_to_ptr.vmem [resolvable:$true] %s27
      %33 = dma.hbm_to_vmem [thread:$0]  %s1, 1920, %s28, [#allocation6], 128, 128, 8
    $region9: #{tpu_custom_call.1} parent=1 // pred_fallthru
      _
    // Predicated region
    $region10: #{tpu_custom_call.1} parent=1 // pred_check
      _
    $region11: #{tpu_custom_call.1} parent=1 // pred_check_branch
      %35 = sbr.rel (0) target = $region13
    $region12: #{tpu_custom_call.1} parent=1 // pred_region
      %36 = dma.done [#allocation3], 896
    $region13: #{tpu_custom_call.1} parent=1 // pred_fallthru
      _
    // Predicated region
    $region14: #{tpu_custom_call.1} parent=1 // pred_check
      _
    $region15: #{tpu_custom_call.1} parent=1 // pred_check_branch
      %38 = sbr.rel (0) target = $region17
    $region16: #{tpu_custom_call.1} parent=1 // pred_region
      %39 = dma.done [#allocation6], 1920
    $region17: #{tpu_custom_call.1} parent=1 // pred_fallthru
      _
    %v40 = vld [vmem:[#allocation2] sm:$0xff]
    %v41 = vld [vmem:[#allocation2 + $0x8] sm:$0xff]
    %v42 = vld [vmem:[#allocation2 + $0x10] sm:$0xff]
    %v43 = vld [vmem:[#allocation2 + $0x18] sm:$0xff]
    %v44 = vld [vmem:[#allocation2 + $0x20] sm:$0xff]
    %v45 = vld [vmem:[#allocation2 + $0x28] sm:$0xff]
    %v46 = vld [vmem:[#allocation2 + $0x30] sm:$0xff]
    %v47 = vld [vmem:[#allocation5] sm:$0xff]
    %v48 = vld [vmem:[#allocation5 + $0x8] sm:$0xff]
    %v49 = vld [vmem:[#allocation5 + $0x10] sm:$0xff]
    %v50 = vld [vmem:[#allocation5 + $0x18] sm:$0xff]
    %v51 = vld [vmem:[#allocation5 + $0x20] sm:$0xff]
    %v52 = vld [vmem:[#allocation5 + $0x28] sm:$0xff]
    %v53 = vld [vmem:[#allocation5 + $0x30] sm:$0xff]
    %v54 = vld [vmem:[#allocation5 + $0x38] sm:$0xff]
    %v55 = vld [vmem:[#allocation5 + $0x40] sm:$0xff]
    %v56 = vld [vmem:[#allocation5 + $0x48] sm:$0xff]
    %v57 = vld [vmem:[#allocation5 + $0x50] sm:$0xff]
    %v58 = vld [vmem:[#allocation5 + $0x58] sm:$0xff]
    %v59 = vld [vmem:[#allocation5 + $0x60] sm:$0xff]
    %v60 = vld [vmem:[#allocation5 + $0x68] sm:$0xff]
    %v61 = vld [vmem:[#allocation5 + $0x70] sm:$0xff]
    %vm62 = vcmask 982016
    %v64 = vsel %vm62, %v40, 0
    %v67 = vsel %vm62, %v41, 0
    %v70 = vsel %vm62, %v42, 0
    %v73 = vsel %vm62, %v43, 0
    %v76 = vsel %vm62, %v44, 0
    %v79 = vsel %vm62, %v45, 0
    %v82 = vsel %vm62, %v46, 0
    %84 = vmatprep.subr.mxu0 0.0
    %v85 = vand.u32 %v47, 4294901760
    %86 = vmatpush1.msra.mxu0 %v85
    %87 = vmatprep.subr.mxu0 0.0
    %v88 = vand.u32 %v48, 4294901760
    %89 = vmatpush1.msra.mxu0 %v88
    %90 = vmatprep.subr.mxu0 0.0
    %v91 = vand.u32 %v49, 4294901760
    %92 = vmatpush1.msra.mxu0 %v91
    %93 = vmatprep.subr.mxu0 0.0
    %v94 = vand.u32 %v50, 4294901760
    %95 = vmatpush1.msra.mxu0 %v94
    %96 = vmatprep.subr.mxu0 0.0
    %v97 = vand.u32 %v51, 4294901760
    %98 = vmatpush1.msra.mxu0 %v97
    %99 = vmatprep.subr.mxu0 0.0
    %v100 = vand.u32 %v52, 4294901760
    %101 = vmatpush1.msra.mxu0 %v100
    %102 = vmatprep.subr.mxu0 0.0
    %v103 = vand.u32 %v53, 4294901760
    %104 = vmatpush1.msra.mxu0 %v103
    %105 = vmatprep.subr.mxu0 0.0
    %v106 = vand.u32 %v54, 4294901760
    %107 = vmatpush1.msra.mxu0 %v106
    %108 = vmatprep.subr.mxu0 0.0
    %v109 = vand.u32 %v55, 4294901760
    %110 = vmatpush1.msra.mxu0 %v109
    %111 = vmatprep.subr.mxu0 0.0
    %v112 = vand.u32 %v56, 4294901760
    %113 = vmatpush1.msra.mxu0 %v112
    %114 = vmatprep.subr.mxu0 0.0
    %v115 = vand.u32 %v57, 4294901760
    %116 = vmatpush1.msra.mxu0 %v115
    %117 = vmatprep.subr.mxu0 0.0
    %v118 = vand.u32 %v58, 4294901760
    %119 = vmatpush1.msra.mxu0 %v118
    %120 = vmatprep.subr.mxu0 0.0
    %v121 = vand.u32 %v59, 4294901760
    %122 = vmatpush1.msra.mxu0 %v121
    %123 = vmatprep.subr.mxu0 0.0
    %v124 = vand.u32 %v60, 4294901760
    %125 = vmatpush1.msra.mxu0 %v124
    %126 = vmatprep.subr.mxu0 0.0
    %v127 = vand.u32 %v61, 4294901760
    %128 = vmatpush1.msra.mxu0 %v127
    %129 = vmatprep.subr.mxu0 0.0
    %130 = vmatpush1.msra.mxu0 0.0
    %131 = vmatprep.subr.mxu0 0.0
    %132 = vmatpush1.msra.mxu0 0.0
    %133 = vmatprep.subr.mxu0 0.0
    %134 = vmatpush1.msra.mxu0 0.0
    %135 = vmatprep.subr.mxu0 0.0
    %136 = vmatpush1.msra.mxu0 0.0
    %137 = vmatprep.subr.mxu0 0.0
    %138 = vmatpush1.msra.mxu0 0.0
    %139 = vmatprep.subr.mxu0 0.0
    %140 = vmatpush1.msra.mxu0 0.0
    %141 = vmatprep.subr.mxu0 0.0
    %142 = vmatpush1.msra.mxu0 0.0
    %143 = vmatprep.subr.mxu0 0.0
    %144 = vmatpush1.msra.mxu0 0.0
    %145 = vmatprep.subr.mxu0 0.0
    %146 = vmatpush1.msra.mxu0 0.0
    %147 = vmatprep.subr.mxu0 0.0
    %148 = vmatpush1.msra.mxu0 0.0
    %149 = vmatprep.subr.mxu0 0.0
    %150 = vmatpush1.msra.mxu0 0.0
    %151 = vmatprep.subr.mxu0 0.0
    %152 = vmatpush1.msra.mxu0 0.0
    %153 = vmatprep.subr.mxu0 0.0
    %154 = vmatpush1.msra.mxu0 0.0
    %155 = vmatprep.subr.mxu0 0.0
    %156 = vmatpush1.msra.mxu0 0.0
    %157 = vmatprep.subr.mxu0 0.0
    %158 = vmatpush1.msra.mxu0 0.0
    %159 = vmatprep.subr.mxu0 0.0
    %160 = vmatpush1.msra.mxu0 0.0
    %161 = vmatprep.subr.mxu0 0.0
    %162 = vmatpush1.msra.mxu0 0.0
    %163 = vmatprep.mubr.f32.mxu0 0.0
    %v164 = vand.u32 %v64, 4294901760
    %v165 = vsub.f32 %v64, %v164
    %v166 = vand.u32 %v165, 4294901760
    %v167 = vsub.f32 %v165, %v166
    %v168 = vand.u32 %v167, 4294901760
    %169 = vmatmul.mubr.f32.gmra.mrb[0].mxu0 %v168
    %v170 = vpop.f32.mrb[0].mxu0
    %v171 = vadd.f32 0.0, %v170
    %v172 = vpop.f32.mrb[0].mxu0
    %173 = vmatprep.mubr.f32.mxu0 0.0
    %v174 = vand.u32 %v67, 4294901760
    %v175 = vsub.f32 %v67, %v174
    %v176 = vand.u32 %v175, 4294901760
    %v177 = vsub.f32 %v175, %v176
    %v178 = vand.u32 %v177, 4294901760
    %179 = vmatmul.mubr.f32.gmra.mrb[0].mxu0 %v178
    %v180 = vpop.f32.mrb[0].mxu0
    %v181 = vadd.f32 0.0, %v180
    %v182 = vpop.f32.mrb[0].mxu0
    %183 = vmatprep.mubr.f32.mxu0 0.0
    %v184 = vand.u32 %v70, 4294901760
    %v185 = vsub.f32 %v70, %v184
    %v186 = vand.u32 %v185, 4294901760
    %v187 = vsub.f32 %v185, %v186
    %v188 = vand.u32 %v187, 4294901760
    %189 = vmatmul.mubr.f32.gmra.mrb[0].mxu0 %v188
    %v190 = vpop.f32.mrb[0].mxu0
    %v191 = vadd.f32 0.0, %v190
    %v192 = vpop.f32.mrb[0].mxu0
    %193 = vmatprep.mubr.f32.mxu0 0.0
    %v194 = vand.u32 %v73, 4294901760
    %v195 = vsub.f32 %v73, %v194
    %v196 = vand.u32 %v195, 4294901760
    %v197 = vsub.f32 %v195, %v196
    %v198 = vand.u32 %v197, 4294901760
    %199 = vmatmul.mubr.f32.gmra.mrb[0].mxu0 %v198
    %v200 = vpop.f32.mrb[0].mxu0
    %v201 = vadd.f32 0.0, %v200
    %v202 = vpop.f32.mrb[0].mxu0
    %203 = vmatprep.mubr.f32.mxu0 0.0
    %v204 = vand.u32 %v76, 4294901760
    %v205 = vsub.f32 %v76, %v204
    %v206 = vand.u32 %v205, 4294901760
    %v207 = vsub.f32 %v205, %v206
    %v208 = vand.u32 %v207, 4294901760
    %209 = vmatmul.mubr.f32.gmra.mrb[0].mxu0 %v208
    %v210 = vpop.f32.mrb[0].mxu0
    %v211 = vadd.f32 0.0, %v210
    %v212 = vpop.f32.mrb[0].mxu0
    %213 = vmatprep.mubr.f32.mxu0 0.0
    %v214 = vand.u32 %v79, 4294901760
    %v215 = vsub.f32 %v79, %v214
    %v216 = vand.u32 %v215, 4294901760
    %v217 = vsub.f32 %v215, %v216
    %v218 = vand.u32 %v217, 4294901760
    %219 = vmatmul.mubr.f32.gmra.mrb[0].mxu0 %v218
    %v220 = vpop.f32.mrb[0].mxu0
    %v221 = vadd.f32 0.0, %v220
    %v222 = vpop.f32.mrb[0].mxu0
    %223 = vmatprep.mubr.f32.mxu0 0.0
    %v224 = vand.u32 %v82, 4294901760
    %v225 = vsub.f32 %v82, %v224
    %v226 = vand.u32 %v225, 4294901760
    %v227 = vsub.f32 %v225, %v226
    %v228 = vand.u32 %v227, 4294901760
    %229 = vmatmul.mubr.f32.gmra.mrb[0].mxu0 %v228
    %v230 = vpop.f32.mrb[0].mxu0
    %v231 = vadd.f32 0.0, %v230
    %v232 = vpop.f32.mrb[0].mxu0
    %233 = vdwg.mxu0
    %234 = vmatprep.subr.mxu0 0.0
    %v235 = vand.u32 %v47, 4294901760
    %v236 = vsub.f32 %v47, %v235
    %v237 = vand.u32 %v236, 4294901760
    %v238 = vsub.f32 %v236, %v237
    %v239 = vand.u32 %v238, 4294901760
    %240 = vmatpush1.msra.mxu0 %v239
    %241 = vmatprep.subr.mxu0 0.0
    %v242 = vand.u32 %v48, 4294901760
    %v243 = vsub.f32 %v48, %v242
    %v244 = vand.u32 %v243, 4294901760
    %v245 = vsub.f32 %v243, %v244
    %v246 = vand.u32 %v245, 4294901760
    %247 = vmatpush1.msra.mxu0 %v246
    %248 = vmatprep.subr.mxu0 0.0
    %v249 = vand.u32 %v49, 4294901760
    %v250 = vsub.f32 %v49, %v249
    %v251 = vand.u32 %v250, 4294901760
    %v252 = vsub.f32 %v250, %v251
    %v253 = vand.u32 %v252, 4294901760
    %254 = vmatpush1.msra.mxu0 %v253
    %255 = vmatprep.subr.mxu0 0.0
    %v256 = vand.u32 %v50, 4294901760
    %v257 = vsub.f32 %v50, %v256
    %v258 = vand.u32 %v257, 4294901760
    %v259 = vsub.f32 %v257, %v258
    %v260 = vand.u32 %v259, 4294901760
    %261 = vmatpush1.msra.mxu0 %v260
    %262 = vmatprep.subr.mxu0 0.0
    %v263 = vand.u32 %v51, 4294901760
    %v264 = vsub.f32 %v51, %v263
    %v265 = vand.u32 %v264, 4294901760
    %v266 = vsub.f32 %v264, %v265
    %v267 = vand.u32 %v266, 4294901760
    %268 = vmatpush1.msra.mxu0 %v267
    %269 = vmatprep.subr.mxu0 0.0
    %v270 = vand.u32 %v52, 4294901760
    %v271 = vsub.f32 %v52, %v270
    %v272 = vand.u32 %v271, 4294901760
    %v273 = vsub.f32 %v271, %v272
    %v274 = vand.u32 %v273, 4294901760
    %275 = vmatpush1.msra.mxu0 %v274
    %276 = vmatprep.subr.mxu0 0.0
    %v277 = vand.u32 %v53, 4294901760
    %v278 = vsub.f32 %v53, %v277
    %v279 = vand.u32 %v278, 4294901760
    %v280 = vsub.f32 %v278, %v279
    %v281 = vand.u32 %v280, 4294901760
    %282 = vmatpush1.msra.mxu0 %v281
    %283 = vmatprep.subr.mxu0 0.0
    %v284 = vand.u32 %v54, 4294901760
    %v285 = vsub.f32 %v54, %v284
    %v286 = vand.u32 %v285, 4294901760
    %v287 = vsub.f32 %v285, %v286
    %v288 = vand.u32 %v287, 4294901760
    %289 = vmatpush1.msra.mxu0 %v288
    %290 = vmatprep.subr.mxu0 0.0
    %v291 = vand.u32 %v55, 4294901760
    %v292 = vsub.f32 %v55, %v291
    %v293 = vand.u32 %v292, 4294901760
    %v294 = vsub.f32 %v292, %v293
    %v295 = vand.u32 %v294, 4294901760
    %296 = vmatpush1.msra.mxu0 %v295
    %297 = vmatprep.subr.mxu0 0.0
    %v298 = vand.u32 %v56, 4294901760
    %v299 = vsub.f32 %v56, %v298
    %v300 = vand.u32 %v299, 4294901760
    %v301 = vsub.f32 %v299, %v300
    %v302 = vand.u32 %v301, 4294901760
    %303 = vmatpush1.msra.mxu0 %v302
    %304 = vmatprep.subr.mxu0 0.0
    %v305 = vand.u32 %v57, 4294901760
    %v306 = vsub.f32 %v57, %v305
    %v307 = vand.u32 %v306, 4294901760
    %v308 = vsub.f32 %v306, %v307
    %v309 = vand.u32 %v308, 4294901760
    %310 = vmatpush1.msra.mxu0 %v309
    %311 = vmatprep.subr.mxu0 0.0
    %v312 = vand.u32 %v58, 4294901760
    %v313 = vsub.f32 %v58, %v312
    %v314 = vand.u32 %v313, 4294901760
    %v315 = vsub.f32 %v313, %v314
    %v316 = vand.u32 %v315, 4294901760
    %317 = vmatpush1.msra.mxu0 %v316
    %318 = vmatprep.subr.mxu0 0.0
    %v319 = vand.u32 %v59, 4294901760
    %v320 = vsub.f32 %v59, %v319
    %v321 = vand.u32 %v320, 4294901760
    %v322 = vsub.f32 %v320, %v321
    %v323 = vand.u32 %v322, 4294901760
    %324 = vmatpush1.msra.mxu0 %v323
    %325 = vmatprep.subr.mxu0 0.0
    %v326 = vand.u32 %v60, 4294901760
    %v327 = vsub.f32 %v60, %v326
    %v328 = vand.u32 %v327, 4294901760
    %v329 = vsub.f32 %v327, %v328
    %v330 = vand.u32 %v329, 4294901760
    %331 = vmatpush1.msra.mxu0 %v330
    %332 = vmatprep.subr.mxu0 0.0
    %v333 = vand.u32 %v61, 4294901760
    %v334 = vsub.f32 %v61, %v333
    %v335 = vand.u32 %v334, 4294901760
    %v336 = vsub.f32 %v334, %v335
    %v337 = vand.u32 %v336, 4294901760
    %338 = vmatpush1.msra.mxu0 %v337
    %339 = vmatprep.subr.mxu0 0.0
    %340 = vmatpush1.msra.mxu0 0.0
    %341 = vmatprep.subr.mxu0 0.0
    %342 = vmatpush1.msra.mxu0 0.0
    %343 = vmatprep.subr.mxu0 0.0
    %344 = vmatpush1.msra.mxu0 0.0
    %345 = vmatprep.subr.mxu0 0.0
    %346 = vmatpush1.msra.mxu0 0.0
    %347 = vmatprep.subr.mxu0 0.0
    %348 = vmatpush1.msra.mxu0 0.0
    %349 = vmatprep.subr.mxu0 0.0
    %350 = vmatpush1.msra.mxu0 0.0
    %351 = vmatprep.subr.mxu0 0.0
    %352 = vmatpush1.msra.mxu0 0.0
    %353 = vmatprep.subr.mxu0 0.0
    %354 = vmatpush1.msra.mxu0 0.0
    %355 = vmatprep.subr.mxu0 0.0
    %356 = vmatpush1.msra.mxu0 0.0
    %357 = vmatprep.subr.mxu0 0.0
    %358 = vmatpush1.msra.mxu0 0.0
    %359 = vmatprep.subr.mxu0 0.0
    %360 = vmatpush1.msra.mxu0 0.0
    %361 = vmatprep.subr.mxu0 0.0
    %362 = vmatpush1.msra.mxu0 0.0
    %363 = vmatprep.subr.mxu0 0.0
    %364 = vmatpush1.msra.mxu0 0.0
    %365 = vmatprep.subr.mxu0 0.0
    %366 = vmatpush1.msra.mxu0 0.0
    %367 = vmatprep.subr.mxu0 0.0
    %368 = vmatpush1.msra.mxu0 0.0
    %369 = vmatprep.subr.mxu0 0.0
    %370 = vmatpush1.msra.mxu0 0.0
    %371 = vmatprep.subr.mxu0 0.0
    %372 = vmatpush1.msra.mxu0 0.0
    %373 = vmatprep.mubr.f32.mxu0 0.0
    %v374 = vand.u32 %v64, 4294901760
    %375 = vmatmul.mubr.f32.gmra.mrb[0].mxu0 %v374
    %v376 = vpop.f32.mrb[0].mxu0
    %v377 = vadd.f32 %v171, %v376
    %v378 = vpop.f32.mrb[0].mxu0
    %379 = vmatprep.mubr.f32.mxu0 0.0
    %v380 = vand.u32 %v67, 4294901760
    %381 = vmatmul.mubr.f32.gmra.mrb[0].mxu0 %v380
    %v382 = vpop.f32.mrb[0].mxu0
    %v383 = vadd.f32 %v181, %v382
    %v384 = vpop.f32.mrb[0].mxu0
    %385 = vmatprep.mubr.f32.mxu0 0.0
    %v386 = vand.u32 %v70, 4294901760
    %387 = vmatmul.mubr.f32.gmra.mrb[0].mxu0 %v386
    %v388 = vpop.f32.mrb[0].mxu0
    %v389 = vadd.f32 %v191, %v388
    %v390 = vpop.f32.mrb[0].mxu0
    %391 = vmatprep.mubr.f32.mxu0 0.0
    %v392 = vand.u32 %v73, 4294901760
    %393 = vmatmul.mubr.f32.gmra.mrb[0].mxu0 %v392
    %v394 = vpop.f32.mrb[0].mxu0
    %v395 = vadd.f32 %v201, %v394
    %v396 = vpop.f32.mrb[0].mxu0
    %397 = vmatprep.mubr.f32.mxu0 0.0
    %v398 = vand.u32 %v76, 4294901760
    %399 = vmatmul.mubr.f32.gmra.mrb[0].mxu0 %v398
    %v400 = vpop.f32.mrb[0].mxu0
    %v401 = vadd.f32 %v211, %v400
    %v402 = vpop.f32.mrb[0].mxu0
    %403 = vmatprep.mubr.f32.mxu0 0.0
    %v404 = vand.u32 %v79, 4294901760
    %405 = vmatmul.mubr.f32.gmra.mrb[0].mxu0 %v404
    %v406 = vpop.f32.mrb[0].mxu0
    %v407 = vadd.f32 %v221, %v406
    %v408 = vpop.f32.mrb[0].mxu0
    %409 = vmatprep.mubr.f32.mxu0 0.0
    %v410 = vand.u32 %v82, 4294901760
    %411 = vmatmul.mubr.f32.gmra.mrb[0].mxu0 %v410
    %v412 = vpop.f32.mrb[0].mxu0
    %v413 = vadd.f32 %v231, %v412
    %v414 = vpop.f32.mrb[0].mxu0
    %415 = vdwg.mxu0
    %416 = vmatprep.subr.mxu0 0.0
    %v417 = vand.u32 %v47, 4294901760
    %v418 = vsub.f32 %v47, %v417
    %419 = vmatpush1.msra.mxu0 %v418
    %420 = vmatprep.subr.mxu0 0.0
    %v421 = vand.u32 %v48, 4294901760
    %v422 = vsub.f32 %v48, %v421
    %423 = vmatpush1.msra.mxu0 %v422
    %424 = vmatprep.subr.mxu0 0.0
    %v425 = vand.u32 %v49, 4294901760
    %v426 = vsub.f32 %v49, %v425
    %427 = vmatpush1.msra.mxu0 %v426
    %428 = vmatprep.subr.mxu0 0.0
    %v429 = vand.u32 %v50, 4294901760
    %v430 = vsub.f32 %v50, %v429
    %431 = vmatpush1.msra.mxu0 %v430
    %432 = vmatprep.subr.mxu0 0.0
    %v433 = vand.u32 %v51, 4294901760
    %v434 = vsub.f32 %v51, %v433
    %435 = vmatpush1.msra.mxu0 %v434
    %436 = vmatprep.subr.mxu0 0.0
    %v437 = vand.u32 %v52, 4294901760
    %v438 = vsub.f32 %v52, %v437
    %439 = vmatpush1.msra.mxu0 %v438
    %440 = vmatprep.subr.mxu0 0.0
    %v441 = vand.u32 %v53, 4294901760
    %v442 = vsub.f32 %v53, %v441
    %443 = vmatpush1.msra.mxu0 %v442
    %444 = vmatprep.subr.mxu0 0.0
    %v445 = vand.u32 %v54, 4294901760
    %v446 = vsub.f32 %v54, %v445
    %447 = vmatpush1.msra.mxu0 %v446
    %448 = vmatprep.subr.mxu0 0.0
    %v449 = vand.u32 %v55, 4294901760
    %v450 = vsub.f32 %v55, %v449
    %451 = vmatpush1.msra.mxu0 %v450
    %452 = vmatprep.subr.mxu0 0.0
    %v453 = vand.u32 %v56, 4294901760
    %v454 = vsub.f32 %v56, %v453
    %455 = vmatpush1.msra.mxu0 %v454
    %456 = vmatprep.subr.mxu0 0.0
    %v457 = vand.u32 %v57, 4294901760
    %v458 = vsub.f32 %v57, %v457
    %459 = vmatpush1.msra.mxu0 %v458
    %460 = vmatprep.subr.mxu0 0.0
    %v461 = vand.u32 %v58, 4294901760
    %v462 = vsub.f32 %v58, %v461
    %463 = vmatpush1.msra.mxu0 %v462
    %464 = vmatprep.subr.mxu0 0.0
    %v465 = vand.u32 %v59, 4294901760
    %v466 = vsub.f32 %v59, %v465
    %467 = vmatpush1.msra.mxu0 %v466
    %468 = vmatprep.subr.mxu0 0.0
    %v469 = vand.u32 %v60, 4294901760
    %v470 = vsub.f32 %v60, %v469
    %471 = vmatpush1.msra.mxu0 %v470
    %472 = vmatprep.subr.mxu0 0.0
    %v473 = vand.u32 %v61, 4294901760
    %v474 = vsub.f32 %v61, %v473
    %475 = vmatpush1.msra.mxu0 %v474
    %476 = vmatprep.subr.mxu0 0.0
    %477 = vmatpush1.msra.mxu0 0.0
    %478 = vmatprep.subr.mxu0 0.0
    %479 = vmatpush1.msra.mxu0 0.0
    %480 = vmatprep.subr.mxu0 0.0
    %481 = vmatpush1.msra.mxu0 0.0
    %482 = vmatprep.subr.mxu0 0.0
    %483 = vmatpush1.msra.mxu0 0.0
    %484 = vmatprep.subr.mxu0 0.0
    %485 = vmatpush1.msra.mxu0 0.0
    %486 = vmatprep.subr.mxu0 0.0
    %487 = vmatpush1.msra.mxu0 0.0
    %488 = vmatprep.subr.mxu0 0.0
    %489 = vmatpush1.msra.mxu0 0.0
    %490 = vmatprep.subr.mxu0 0.0
    %491 = vmatpush1.msra.mxu0 0.0
    %492 = vmatprep.subr.mxu0 0.0
    %493 = vmatpush1.msra.mxu0 0.0
    %494 = vmatprep.subr.mxu0 0.0
    %495 = vmatpush1.msra.mxu0 0.0
    %496 = vmatprep.subr.mxu0 0.0
    %497 = vmatpush1.msra.mxu0 0.0
    %498 = vmatprep.subr.mxu0 0.0
    %499 = vmatpush1.msra.mxu0 0.0
    %500 = vmatprep.subr.mxu0 0.0
    %501 = vmatpush1.msra.mxu0 0.0
    %502 = vmatprep.subr.mxu0 0.0
    %503 = vmatpush1.msra.mxu0 0.0
    %504 = vmatprep.subr.mxu0 0.0
    %505 = vmatpush1.msra.mxu0 0.0
    %506 = vmatprep.subr.mxu0 0.0
    %507 = vmatpush1.msra.mxu0 0.0
    %508 = vmatprep.subr.mxu0 0.0
    %509 = vmatpush1.msra.mxu0 0.0
    %510 = vmatprep.mubr.f32.mxu0 0.0
    %v511 = vand.u32 %v64, 4294901760
    %v512 = vsub.f32 %v64, %v511
    %513 = vmatmul.mubr.f32.gmra.mrb[0].mxu0 %v512
    %v514 = vpop.f32.mrb[0].mxu0
    %v515 = vadd.f32 %v377, %v514
    %v516 = vpop.f32.mrb[0].mxu0
    %517 = vmatprep.mubr.f32.mxu0 0.0
    %v518 = vand.u32 %v67, 4294901760
    %v519 = vsub.f32 %v67, %v518
    %520 = vmatmul.mubr.f32.gmra.mrb[0].mxu0 %v519
    %v521 = vpop.f32.mrb[0].mxu0
    %v522 = vadd.f32 %v383, %v521
    %v523 = vpop.f32.mrb[0].mxu0
    %524 = vmatprep.mubr.f32.mxu0 0.0
    %v525 = vand.u32 %v70, 4294901760
    %v526 = vsub.f32 %v70, %v525
    %527 = vmatmul.mubr.f32.gmra.mrb[0].mxu0 %v526
    %v528 = vpop.f32.mrb[0].mxu0
    %v529 = vadd.f32 %v389, %v528
    %v530 = vpop.f32.mrb[0].mxu0
    %531 = vmatprep.mubr.f32.mxu0 0.0
    %v532 = vand.u32 %v73, 4294901760
    %v533 = vsub.f32 %v73, %v532
    %534 = vmatmul.mubr.f32.gmra.mrb[0].mxu0 %v533
    %v535 = vpop.f32.mrb[0].mxu0
    %v536 = vadd.f32 %v395, %v535
    %v537 = vpop.f32.mrb[0].mxu0
    %538 = vmatprep.mubr.f32.mxu0 0.0
    %v539 = vand.u32 %v76, 4294901760
    %v540 = vsub.f32 %v76, %v539
    %541 = vmatmul.mubr.f32.gmra.mrb[0].mxu0 %v540
    %v542 = vpop.f32.mrb[0].mxu0
    %v543 = vadd.f32 %v401, %v542
    %v544 = vpop.f32.mrb[0].mxu0
    %545 = vmatprep.mubr.f32.mxu0 0.0
    %v546 = vand.u32 %v79, 4294901760
    %v547 = vsub.f32 %v79, %v546
    %548 = vmatmul.mubr.f32.gmra.mrb[0].mxu0 %v547
    %v549 = vpop.f32.mrb[0].mxu0
    %v550 = vadd.f32 %v407, %v549
    %v551 = vpop.f32.mrb[0].mxu0
    %552 = vmatprep.mubr.f32.mxu0 0.0
    %v553 = vand.u32 %v82, 4294901760
    %v554 = vsub.f32 %v82, %v553
    %555 = vmatmul.mubr.f32.gmra.mrb[0].mxu0 %v554
    %v556 = vpop.f32.mrb[0].mxu0
    %v557 = vadd.f32 %v413, %v556
    %v558 = vpop.f32.mrb[0].mxu0
    %559 = vdwg.mxu0
    %560 = vmatprep.subr.mxu0 0.0
    %v561 = vand.u32 %v47, 4294901760
    %562 = vmatpush1.msra.mxu0 %v561
    %563 = vmatprep.subr.mxu0 0.0
    %v564 = vand.u32 %v48, 4294901760
    %565 = vmatpush1.msra.mxu0 %v564
    %566 = vmatprep.subr.mxu0 0.0
    %v567 = vand.u32 %v49, 4294901760
    %568 = vmatpush1.msra.mxu0 %v567
    %569 = vmatprep.subr.mxu0 0.0
    %v570 = vand.u32 %v50, 4294901760
    %571 = vmatpush1.msra.mxu0 %v570
    %572 = vmatprep.subr.mxu0 0.0
    %v573 = vand.u32 %v51, 4294901760
    %574 = vmatpush1.msra.mxu0 %v573
    %575 = vmatprep.subr.mxu0 0.0
    %v576 = vand.u32 %v52, 4294901760
    %577 = vmatpush1.msra.mxu0 %v576
    %578 = vmatprep.subr.mxu0 0.0
    %v579 = vand.u32 %v53, 4294901760
    %580 = vmatpush1.msra.mxu0 %v579
    %581 = vmatprep.subr.mxu0 0.0
    %v582 = vand.u32 %v54, 4294901760
    %583 = vmatpush1.msra.mxu0 %v582
    %584 = vmatprep.subr.mxu0 0.0
    %v585 = vand.u32 %v55, 4294901760
    %586 = vmatpush1.msra.mxu0 %v585
    %587 = vmatprep.subr.mxu0 0.0
    %v588 = vand.u32 %v56, 4294901760
    %589 = vmatpush1.msra.mxu0 %v588
    %590 = vmatprep.subr.mxu0 0.0
    %v591 = vand.u32 %v57, 4294901760
    %592 = vmatpush1.msra.mxu0 %v591
    %593 = vmatprep.subr.mxu0 0.0
    %v594 = vand.u32 %v58, 4294901760
    %595 = vmatpush1.msra.mxu0 %v594
    %596 = vmatprep.subr.mxu0 0.0
    %v597 = vand.u32 %v59, 4294901760
    %598 = vmatpush1.msra.mxu0 %v597
    %599 = vmatprep.subr.mxu0 0.0
    %v600 = vand.u32 %v60, 4294901760
    %601 = vmatpush1.msra.mxu0 %v600
    %602 = vmatprep.subr.mxu0 0.0
    %v603 = vand.u32 %v61, 4294901760
    %604 = vmatpush1.msra.mxu0 %v603
    %605 = vmatprep.subr.mxu0 0.0
    %606 = vmatpush1.msra.mxu0 0.0
    %607 = vmatprep.subr.mxu0 0.0
    %608 = vmatpush1.msra.mxu0 0.0
    %609 = vmatprep.subr.mxu0 0.0
    %610 = vmatpush1.msra.mxu0 0.0
    %611 = vmatprep.subr.mxu0 0.0
    %612 = vmatpush1.msra.mxu0 0.0
    %613 = vmatprep.subr.mxu0 0.0
    %614 = vmatpush1.msra.mxu0 0.0
    %615 = vmatprep.subr.mxu0 0.0
    %616 = vmatpush1.msra.mxu0 0.0
    %617 = vmatprep.subr.mxu0 0.0
    %618 = vmatpush1.msra.mxu0 0.0
    %619 = vmatprep.subr.mxu0 0.0
    %620 = vmatpush1.msra.mxu0 0.0
    %621 = vmatprep.subr.mxu0 0.0
    %622 = vmatpush1.msra.mxu0 0.0
    %623 = vmatprep.subr.mxu0 0.0
    %624 = vmatpush1.msra.mxu0 0.0
    %625 = vmatprep.subr.mxu0 0.0
    %626 = vmatpush1.msra.mxu0 0.0
    %627 = vmatprep.subr.mxu0 0.0
    %628 = vmatpush1.msra.mxu0 0.0
    %629 = vmatprep.subr.mxu0 0.0
    %630 = vmatpush1.msra.mxu0 0.0
    %631 = vmatprep.subr.mxu0 0.0
    %632 = vmatpush1.msra.mxu0 0.0
    %633 = vmatprep.subr.mxu0 0.0
    %634 = vmatpush1.msra.mxu0 0.0
    %635 = vmatprep.subr.mxu0 0.0
    %636 = vmatpush1.msra.mxu0 0.0
    %637 = vmatprep.subr.mxu0 0.0
    %638 = vmatpush1.msra.mxu0 0.0
    %639 = vmatprep.mubr.f32.mxu0 0.0
    %v640 = vand.u32 %v64, 4294901760
    %v641 = vsub.f32 %v64, %v640
    %v642 = vand.u32 %v641, 4294901760
    %643 = vmatmul.mubr.f32.gmra.mrb[0].mxu0 %v642
    %v644 = vpop.f32.mrb[0].mxu0
    %v645 = vadd.f32 %v515, %v644
    %v646 = vpop.f32.mrb[0].mxu0
    %647 = vmatprep.mubr.f32.mxu0 0.0
    %v648 = vand.u32 %v67, 4294901760
    %v649 = vsub.f32 %v67, %v648
    %v650 = vand.u32 %v649, 4294901760
    %651 = vmatmul.mubr.f32.gmra.mrb[0].mxu0 %v650
    %v652 = vpop.f32.mrb[0].mxu0
    %v653 = vadd.f32 %v522, %v652
    %v654 = vpop.f32.mrb[0].mxu0
    %655 = vmatprep.mubr.f32.mxu0 0.0
    %v656 = vand.u32 %v70, 4294901760
    %v657 = vsub.f32 %v70, %v656
    %v658 = vand.u32 %v657, 4294901760
    %659 = vmatmul.mubr.f32.gmra.mrb[0].mxu0 %v658
    %v660 = vpop.f32.mrb[0].mxu0
    %v661 = vadd.f32 %v529, %v660
    %v662 = vpop.f32.mrb[0].mxu0
    %663 = vmatprep.mubr.f32.mxu0 0.0
    %v664 = vand.u32 %v73, 4294901760
    %v665 = vsub.f32 %v73, %v664
    %v666 = vand.u32 %v665, 4294901760
    %667 = vmatmul.mubr.f32.gmra.mrb[0].mxu0 %v666
    %v668 = vpop.f32.mrb[0].mxu0
    %v669 = vadd.f32 %v536, %v668
    %v670 = vpop.f32.mrb[0].mxu0
    %671 = vmatprep.mubr.f32.mxu0 0.0
    %v672 = vand.u32 %v76, 4294901760
    %v673 = vsub.f32 %v76, %v672
    %v674 = vand.u32 %v673, 4294901760
    %675 = vmatmul.mubr.f32.gmra.mrb[0].mxu0 %v674
    %v676 = vpop.f32.mrb[0].mxu0
    %v677 = vadd.f32 %v543, %v676
    %v678 = vpop.f32.mrb[0].mxu0
    %679 = vmatprep.mubr.f32.mxu0 0.0
    %v680 = vand.u32 %v79, 4294901760
    %v681 = vsub.f32 %v79, %v680
    %v682 = vand.u32 %v681, 4294901760
    %683 = vmatmul.mubr.f32.gmra.mrb[0].mxu0 %v682
    %v684 = vpop.f32.mrb[0].mxu0
    %v685 = vadd.f32 %v550, %v684
    %v686 = vpop.f32.mrb[0].mxu0
    %687 = vmatprep.mubr.f32.mxu0 0.0
    %v688 = vand.u32 %v82, 4294901760
    %v689 = vsub.f32 %v82, %v688
    %v690 = vand.u32 %v689, 4294901760
    %691 = vmatmul.mubr.f32.gmra.mrb[0].mxu0 %v690
    %v692 = vpop.f32.mrb[0].mxu0
    %v693 = vadd.f32 %v557, %v692
    %v694 = vpop.f32.mrb[0].mxu0
    %695 = vdwg.mxu0
    %696 = vmatprep.subr.mxu0 0.0
    %v697 = vand.u32 %v47, 4294901760
    %v698 = vsub.f32 %v47, %v697
    %v699 = vand.u32 %v698, 4294901760
    %700 = vmatpush1.msra.mxu0 %v699
    %701 = vmatprep.subr.mxu0 0.0
    %v702 = vand.u32 %v48, 4294901760
    %v703 = vsub.f32 %v48, %v702
    %v704 = vand.u32 %v703, 4294901760
    %705 = vmatpush1.msra.mxu0 %v704
    %706 = vmatprep.subr.mxu0 0.0
    %v707 = vand.u32 %v49, 4294901760
    %v708 = vsub.f32 %v49, %v707
    %v709 = vand.u32 %v708, 4294901760
    %710 = vmatpush1.msra.mxu0 %v709
    %711 = vmatprep.subr.mxu0 0.0
    %v712 = vand.u32 %v50, 4294901760
    %v713 = vsub.f32 %v50, %v712
    %v714 = vand.u32 %v713, 4294901760
    %715 = vmatpush1.msra.mxu0 %v714
    %716 = vmatprep.subr.mxu0 0.0
    %v717 = vand.u32 %v51, 4294901760
    %v718 = vsub.f32 %v51, %v717
    %v719 = vand.u32 %v718, 4294901760
    %720 = vmatpush1.msra.mxu0 %v719
    %721 = vmatprep.subr.mxu0 0.0
    %v722 = vand.u32 %v52, 4294901760
    %v723 = vsub.f32 %v52, %v722
    %v724 = vand.u32 %v723, 4294901760
    %725 = vmatpush1.msra.mxu0 %v724
    %726 = vmatprep.subr.mxu0 0.0
    %v727 = vand.u32 %v53, 4294901760
    %v728 = vsub.f32 %v53, %v727
    %v729 = vand.u32 %v728, 4294901760
    %730 = vmatpush1.msra.mxu0 %v729
    %731 = vmatprep.subr.mxu0 0.0
    %v732 = vand.u32 %v54, 4294901760
    %v733 = vsub.f32 %v54, %v732
    %v734 = vand.u32 %v733, 4294901760
    %735 = vmatpush1.msra.mxu0 %v734
    %736 = vmatprep.subr.mxu0 0.0
    %v737 = vand.u32 %v55, 4294901760
    %v738 = vsub.f32 %v55, %v737
    %v739 = vand.u32 %v738, 4294901760
    %740 = vmatpush1.msra.mxu0 %v739
    %741 = vmatprep.subr.mxu0 0.0
    %v742 = vand.u32 %v56, 4294901760
    %v743 = vsub.f32 %v56, %v742
    %v744 = vand.u32 %v743, 4294901760
    %745 = vmatpush1.msra.mxu0 %v744
    %746 = vmatprep.subr.mxu0 0.0
    %v747 = vand.u32 %v57, 4294901760
    %v748 = vsub.f32 %v57, %v747
    %v749 = vand.u32 %v748, 4294901760
    %750 = vmatpush1.msra.mxu0 %v749
    %751 = vmatprep.subr.mxu0 0.0
    %v752 = vand.u32 %v58, 4294901760
    %v753 = vsub.f32 %v58, %v752
    %v754 = vand.u32 %v753, 4294901760
    %755 = vmatpush1.msra.mxu0 %v754
    %756 = vmatprep.subr.mxu0 0.0
    %v757 = vand.u32 %v59, 4294901760
    %v758 = vsub.f32 %v59, %v757
    %v759 = vand.u32 %v758, 4294901760
    %760 = vmatpush1.msra.mxu0 %v759
    %761 = vmatprep.subr.mxu0 0.0
    %v762 = vand.u32 %v60, 4294901760
    %v763 = vsub.f32 %v60, %v762
    %v764 = vand.u32 %v763, 4294901760
    %765 = vmatpush1.msra.mxu0 %v764
    %766 = vmatprep.subr.mxu0 0.0
    %v767 = vand.u32 %v61, 4294901760
    %v768 = vsub.f32 %v61, %v767
    %v769 = vand.u32 %v768, 4294901760
    %770 = vmatpush1.msra.mxu0 %v769
    %771 = vmatprep.subr.mxu0 0.0
    %772 = vmatpush1.msra.mxu0 0.0
    %773 = vmatprep.subr.mxu0 0.0
    %774 = vmatpush1.msra.mxu0 0.0
    %775 = vmatprep.subr.mxu0 0.0
    %776 = vmatpush1.msra.mxu0 0.0
    %777 = vmatprep.subr.mxu0 0.0
    %778 = vmatpush1.msra.mxu0 0.0
    %779 = vmatprep.subr.mxu0 0.0
    %780 = vmatpush1.msra.mxu0 0.0
    %781 = vmatprep.subr.mxu0 0.0
    %782 = vmatpush1.msra.mxu0 0.0
    %783 = vmatprep.subr.mxu0 0.0
    %784 = vmatpush1.msra.mxu0 0.0
    %785 = vmatprep.subr.mxu0 0.0
    %786 = vmatpush1.msra.mxu0 0.0
    %787 = vmatprep.subr.mxu0 0.0
    %788 = vmatpush1.msra.mxu0 0.0
    %789 = vmatprep.subr.mxu0 0.0
    %790 = vmatpush1.msra.mxu0 0.0
    %791 = vmatprep.subr.mxu0 0.0
    %792 = vmatpush1.msra.mxu0 0.0
    %793 = vmatprep.subr.mxu0 0.0
    %794 = vmatpush1.msra.mxu0 0.0
    %795 = vmatprep.subr.mxu0 0.0
    %796 = vmatpush1.msra.mxu0 0.0
    %797 = vmatprep.subr.mxu0 0.0
    %798 = vmatpush1.msra.mxu0 0.0
    %799 = vmatprep.subr.mxu0 0.0
    %800 = vmatpush1.msra.mxu0 0.0
    %801 = vmatprep.subr.mxu0 0.0
    %802 = vmatpush1.msra.mxu0 0.0
    %803 = vmatprep.subr.mxu0 0.0
    %804 = vmatpush1.msra.mxu0 0.0
    %805 = vmatprep.mubr.f32.mxu0 0.0
    %v806 = vand.u32 %v64, 4294901760
    %807 = vmatmul.mubr.f32.gmra.mrb[0].mxu0 %v806
    %v808 = vpop.f32.mrb[0].mxu0
    %v809 = vadd.f32 %v645, %v808
    %v810 = vpop.f32.mrb[0].mxu0
    %811 = vmatprep.mubr.f32.mxu0 0.0
    %v812 = vand.u32 %v67, 4294901760
    %813 = vmatmul.mubr.f32.gmra.mrb[0].mxu0 %v812
    %v814 = vpop.f32.mrb[0].mxu0
    %v815 = vadd.f32 %v653, %v814
    %v816 = vpop.f32.mrb[0].mxu0
    %817 = vmatprep.mubr.f32.mxu0 0.0
    %v818 = vand.u32 %v70, 4294901760
    %819 = vmatmul.mubr.f32.gmra.mrb[0].mxu0 %v818
    %v820 = vpop.f32.mrb[0].mxu0
    %v821 = vadd.f32 %v661, %v820
    %v822 = vpop.f32.mrb[0].mxu0
    %823 = vmatprep.mubr.f32.mxu0 0.0
    %v824 = vand.u32 %v73, 4294901760
    %825 = vmatmul.mubr.f32.gmra.mrb[0].mxu0 %v824
    %v826 = vpop.f32.mrb[0].mxu0
    %v827 = vadd.f32 %v669, %v826
    %v828 = vpop.f32.mrb[0].mxu0
    %829 = vmatprep.mubr.f32.mxu0 0.0
    %v830 = vand.u32 %v76, 4294901760
    %831 = vmatmul.mubr.f32.gmra.mrb[0].mxu0 %v830
    %v832 = vpop.f32.mrb[0].mxu0
    %v833 = vadd.f32 %v677, %v832
    %v834 = vpop.f32.mrb[0].mxu0
    %835 = vmatprep.mubr.f32.mxu0 0.0
    %v836 = vand.u32 %v79, 4294901760
    %837 = vmatmul.mubr.f32.gmra.mrb[0].mxu0 %v836
    %v838 = vpop.f32.mrb[0].mxu0
    %v839 = vadd.f32 %v685, %v838
    %v840 = vpop.f32.mrb[0].mxu0
    %841 = vmatprep.mubr.f32.mxu0 0.0
    %v842 = vand.u32 %v82, 4294901760
    %843 = vmatmul.mubr.f32.gmra.mrb[0].mxu0 %v842
    %v844 = vpop.f32.mrb[0].mxu0
    %v845 = vadd.f32 %v693, %v844
    %v846 = vpop.f32.mrb[0].mxu0
    %847 = vdwg.mxu0
    %848 = vmatprep.subr.mxu0 0.0
    %v849 = vand.u32 %v47, 4294901760
    %850 = vmatpush1.msra.mxu0 %v849
    %851 = vmatprep.subr.mxu0 0.0
    %v852 = vand.u32 %v48, 4294901760
    %853 = vmatpush1.msra.mxu0 %v852
    %854 = vmatprep.subr.mxu0 0.0
    %v855 = vand.u32 %v49, 4294901760
    %856 = vmatpush1.msra.mxu0 %v855
    %857 = vmatprep.subr.mxu0 0.0
    %v858 = vand.u32 %v50, 4294901760
    %859 = vmatpush1.msra.mxu0 %v858
    %860 = vmatprep.subr.mxu0 0.0
    %v861 = vand.u32 %v51, 4294901760
    %862 = vmatpush1.msra.mxu0 %v861
    %863 = vmatprep.subr.mxu0 0.0
    %v864 = vand.u32 %v52, 4294901760
    %865 = vmatpush1.msra.mxu0 %v864
    %866 = vmatprep.subr.mxu0 0.0
    %v867 = vand.u32 %v53, 4294901760
    %868 = vmatpush1.msra.mxu0 %v867
    %869 = vmatprep.subr.mxu0 0.0
    %v870 = vand.u32 %v54, 4294901760
    %871 = vmatpush1.msra.mxu0 %v870
    %872 = vmatprep.subr.mxu0 0.0
    %v873 = vand.u32 %v55, 4294901760
    %874 = vmatpush1.msra.mxu0 %v873
    %875 = vmatprep.subr.mxu0 0.0
    %v876 = vand.u32 %v56, 4294901760
    %877 = vmatpush1.msra.mxu0 %v876
    %878 = vmatprep.subr.mxu0 0.0
    %v879 = vand.u32 %v57, 4294901760
    %880 = vmatpush1.msra.mxu0 %v879
    %881 = vmatprep.subr.mxu0 0.0
    %v882 = vand.u32 %v58, 4294901760
    %883 = vmatpush1.msra.mxu0 %v882
    %884 = vmatprep.subr.mxu0 0.0
    %v885 = vand.u32 %v59, 4294901760
    %886 = vmatpush1.msra.mxu0 %v885
    %887 = vmatprep.subr.mxu0 0.0
    %v888 = vand.u32 %v60, 4294901760
    %889 = vmatpush1.msra.mxu0 %v888
    %890 = vmatprep.subr.mxu0 0.0
    %v891 = vand.u32 %v61, 4294901760
    %892 = vmatpush1.msra.mxu0 %v891
    %893 = vmatprep.subr.mxu0 0.0
    %894 = vmatpush1.msra.mxu0 0.0
    %895 = vmatprep.subr.mxu0 0.0
    %896 = vmatpush1.msra.mxu0 0.0
    %897 = vmatprep.subr.mxu0 0.0
    %898 = vmatpush1.msra.mxu0 0.0
    %899 = vmatprep.subr.mxu0 0.0
    %900 = vmatpush1.msra.mxu0 0.0
    %901 = vmatprep.subr.mxu0 0.0
    %902 = vmatpush1.msra.mxu0 0.0
    %903 = vmatprep.subr.mxu0 0.0
    %904 = vmatpush1.msra.mxu0 0.0
    %905 = vmatprep.subr.mxu0 0.0
    %906 = vmatpush1.msra.mxu0 0.0
    %907 = vmatprep.subr.mxu0 0.0
    %908 = vmatpush1.msra.mxu0 0.0
    %909 = vmatprep.subr.mxu0 0.0
    %910 = vmatpush1.msra.mxu0 0.0
    %911 = vmatprep.subr.mxu0 0.0
    %912 = vmatpush1.msra.mxu0 0.0
    %913 = vmatprep.subr.mxu0 0.0
    %914 = vmatpush1.msra.mxu0 0.0
    %915 = vmatprep.subr.mxu0 0.0
    %916 = vmatpush1.msra.mxu0 0.0
    %917 = vmatprep.subr.mxu0 0.0
    %918 = vmatpush1.msra.mxu0 0.0
    %919 = vmatprep.subr.mxu0 0.0
    %920 = vmatpush1.msra.mxu0 0.0
    %921 = vmatprep.subr.mxu0 0.0
    %922 = vmatpush1.msra.mxu0 0.0
    %923 = vmatprep.subr.mxu0 0.0
    %924 = vmatpush1.msra.mxu0 0.0
    %925 = vmatprep.subr.mxu0 0.0
    %926 = vmatpush1.msra.mxu0 0.0
    %927 = vmatprep.mubr.f32.mxu0 0.0
    %v928 = vand.u32 %v64, 4294901760
    %929 = vmatmul.mubr.f32.gmra.mrb[0].mxu0 %v928
    %v930 = vpop.f32.mrb[0].mxu0
    %v931 = vadd.f32 %v809, %v930
    %v932 = vpop.f32.mrb[0].mxu0
    %933 = vmatprep.mubr.f32.mxu0 0.0
    %v934 = vand.u32 %v67, 4294901760
    %935 = vmatmul.mubr.f32.gmra.mrb[0].mxu0 %v934
    %v936 = vpop.f32.mrb[0].mxu0
    %v937 = vadd.f32 %v815, %v936
    %v938 = vpop.f32.mrb[0].mxu0
    %939 = vmatprep.mubr.f32.mxu0 0.0
    %v940 = vand.u32 %v70, 4294901760
    %941 = vmatmul.mubr.f32.gmra.mrb[0].mxu0 %v940
    %v942 = vpop.f32.mrb[0].mxu0
    %v943 = vadd.f32 %v821, %v942
    %v944 = vpop.f32.mrb[0].mxu0
    %945 = vmatprep.mubr.f32.mxu0 0.0
    %v946 = vand.u32 %v73, 4294901760
    %947 = vmatmul.mubr.f32.gmra.mrb[0].mxu0 %v946
    %v948 = vpop.f32.mrb[0].mxu0
    %v949 = vadd.f32 %v827, %v948
    %v950 = vpop.f32.mrb[0].mxu0
    %951 = vmatprep.mubr.f32.mxu0 0.0
    %v952 = vand.u32 %v76, 4294901760
    %953 = vmatmul.mubr.f32.gmra.mrb[0].mxu0 %v952
    %v954 = vpop.f32.mrb[0].mxu0
    %v955 = vadd.f32 %v833, %v954
    %v956 = vpop.f32.mrb[0].mxu0
    %957 = vmatprep.mubr.f32.mxu0 0.0
    %v958 = vand.u32 %v79, 4294901760
    %959 = vmatmul.mubr.f32.gmra.mrb[0].mxu0 %v958
    %v960 = vpop.f32.mrb[0].mxu0
    %v961 = vadd.f32 %v839, %v960
    %v962 = vpop.f32.mrb[0].mxu0
    %963 = vmatprep.mubr.f32.mxu0 0.0
    %v964 = vand.u32 %v82, 4294901760
    %965 = vmatmul.mubr.f32.gmra.mrb[0].mxu0 %v964
    %v966 = vpop.f32.mrb[0].mxu0
    %v967 = vadd.f32 %v845, %v966
    %v968 = vpop.f32.mrb[0].mxu0
    %969 = vdwg.mxu0
    %970 = vst.msk [vmem:[#allocation7] sm:$0xff] %vm62, %v931
    %971 = vst.msk [vmem:[#allocation7 + $0x8] sm:$0xff] %vm62, %v937
    %972 = vst.msk [vmem:[#allocation7 + $0x10] sm:$0xff] %vm62, %v943
    %973 = vst.msk [vmem:[#allocation7 + $0x18] sm:$0xff] %vm62, %v949
    %974 = vst.msk [vmem:[#allocation7 + $0x20] sm:$0xff] %vm62, %v955
    %975 = vst.msk [vmem:[#allocation7 + $0x28] sm:$0xff] %vm62, %v961
    %976 = vst.msk [vmem:[#allocation7 + $0x30] sm:$0xff] %vm62, %v967
    // Predicated region
    $region18: #{tpu_custom_call.1} parent=1 // pred_check
      _
    $region19: #{tpu_custom_call.1} parent=1 // pred_check_branch
      %978 = sbr.rel (0) target = $region21
    $region20: #{tpu_custom_call.1} parent=1 // pred_region
      %s980 = ssub.s32 896, 896
      %981 = vsyncadd [#allocation4], %s980
      %s982 = sshll.u32 [#allocation7], 4
      %s983 = int_to_ptr.vmem [resolvable:$true] %s982
      %988 = dma.vmem_to_hbm [thread:$0]  %s983, 896, %s2, [#allocation4], 128, 128, 8
    $region21: #{tpu_custom_call.1} parent=1 // pred_fallthru
      _
    // Predicated region
    $region22: #{tpu_custom_call.1} parent=1 // pred_check
      _
    $region23: #{tpu_custom_call.1} parent=1 // pred_check_branch
      %990 = sbr.rel (0) target = $region25
    $region24: #{tpu_custom_call.1} parent=1 // pred_region
      %991 = dma.done [#allocation4], 896
    $region25: #{tpu_custom_call.1} parent=1 // pred_fallthru
      _
    %992 = vsyncpa [#allocation3], 1
    %993 = vsyncpa [#allocation6], 1
    %994 = vsyncpa [#allocation4], 1

</llo_original>
